<compile_context>
chip_gen: v7x
topology: tpu7x:2x2x1
jax: 0.10.0
libtpu: 0.0.40
codegen_flags: <defaults>
</compile_context>

<pallas_src>
import jax
import jax.numpy as jnp
import numpy as np
from jax.experimental import pallas as pl
from jax.experimental.pallas import tpu as pltpu

KS = (3, 3)     # the original file's global `kernel`
ST = (2, 2)     # global `stride`
PAD = (1, 1)    # global `pad`
EPS = 1e-5      # PyTorch BatchNorm2d default eps

# TODO(synk): BatchNorm2d is implemented in inference mode (running stats);
# training-mode batch-statistic computation is not reproduced here.


def _round_up(x, m):
    return ((x + m - 1) // m) * m


def _fused_conv_bn_relu_kernel(p_ref, w_ref, ss_ref, o_ref):
    # p_ref : (tm, Kp)  bf16 im2col patches
    # w_ref : (Kp, tn)  bf16 flattened conv weights
    # ss_ref: (8,  tn)  f32; row 0 = BN scale, row 1 = BN shift (conv bias folded)
    acc = jnp.dot(p_ref[...], w_ref[...], preferred_element_type=jnp.float32)
    z = acc * ss_ref[0:1, :] + ss_ref[1:2, :]      # BN affine in f32
    o_ref[...] = jnp.maximum(z, 0.0).astype(o_ref.dtype)   # ReLU


def conv2d_forward(x_nchw, params, *, tm=512, tn=128):
    N, Cin, H, W = x_nchw.shape
    KH, KW = KS
    sh, sw = ST
    ph, pw = PAD
    w_oihw = params["conv_w"]
    Cout = w_oihw.shape[0]

    Ho = (H + 2 * ph - KH) // sh + 1
    Wo = (W + 2 * pw - KW) // sw + 1

    # NCHW -> NHWC, zero-pad spatially (XLA glue).
    x_nhwc = jnp.transpose(x_nchw, (0, 2, 3, 1))
    xpad = jnp.pad(x_nhwc, ((0, 0), (ph, ph), (pw, pw), (0, 0)))

    # Strided im2col:
    #   patches[n, ho, wo, (kh*KW + kw)*Cin + ci] = xpad[n, ho*sh + kh, wo*sw + kw, ci]
    cols = []
    for kh in range(KH):
        for kw in range(KW):
            cols.append(xpad[:, kh:kh + (Ho - 1) * sh + 1:sh,
                               kw:kw + (Wo - 1) * sw + 1:sw, :])
    K = KH * KW * Cin
    M = N * Ho * Wo
    patches = jnp.stack(cols, axis=3).reshape(M, K)

    # Lane-dense padding: K, Cout up to multiples of 128; M up to a tile multiple.
    Kp = _round_up(K, 128)
    Cp = _round_up(Cout, tn)
    tm_eff = min(tm, _round_up(M, 128))
    Mp = _round_up(M, tm_eff)

    patches = jnp.pad(patches, ((0, Mp - M), (0, Kp - K))).astype(jnp.bfloat16)

    # (Cout, Cin, KH, KW) -> (KH, KW, Cin, Cout) -> (K, Cout); matches im2col order.
    w2 = jnp.transpose(w_oihw, (2, 3, 1, 0)).reshape(K, Cout)
    w2 = jnp.pad(w2, ((0, Kp - K), (0, Cp - Cout))).astype(jnp.bfloat16)

    # Fold BN (inference mode) + conv bias into one scale/shift pair and pack
    # them into a single (8, Cp) f32 array (one DMA, one double buffer).
    scale = params["bn_g"] / jnp.sqrt(params["bn_v"] + EPS)
    shift = params["bn_b"] - params["bn_m"] * scale + scale * params["conv_b"]
    ss = jnp.zeros((8, Cp), jnp.float32)
    ss = ss.at[0, :Cout].set(scale.astype(jnp.float32))
    ss = ss.at[1, :Cout].set(shift.astype(jnp.float32))

    grid = (Mp // tm_eff, Cp // tn)
    cost = pl.CostEstimate(
        flops=2 * M * K * Cout,
        transcendentals=0,
        bytes_accessed=(patches.size * 2 + w2.size * 2 + ss.size * 4 + Mp * Cp * 4),
    )

    out_flat = pl.pallas_call(
        _fused_conv_bn_relu_kernel,
        out_shape=jax.ShapeDtypeStruct((Mp, Cp), jnp.float32),
        grid_spec=pltpu.PrefetchScalarGridSpec(
            num_scalar_prefetch=0,
            grid=grid,
            in_specs=[
                pl.BlockSpec((tm_eff, Kp), lambda i, j: (i, 0)),   # patches tile
                pl.BlockSpec((Kp, tn), lambda i, j: (0, j)),       # weight tile
                pl.BlockSpec((8, tn), lambda i, j: (0, j)),        # packed BN affine
            ],
            out_specs=pl.BlockSpec((tm_eff, tn), lambda i, j: (i, j)),
        ),
        compiler_params=pltpu.CompilerParams(
            dimension_semantics=("parallel", "parallel"),
            vmem_limit_bytes=48 * 1024 * 1024,
        ),
        cost_estimate=cost,
    )(patches, w2, ss)

    out = out_flat[:M, :Cout].reshape(N, Ho, Wo, Cout)
    return jnp.transpose(out, (0, 3, 1, 2))   # back to NCHW like PyTorch


def conv2d_reference(x_nchw, params):
    """Pure-JAX reference (f32) with the same semantics, for correctness."""
    ph, pw = PAD
    y = jax.lax.conv_general_dilated(
        x_nchw, params["conv_w"], window_strides=ST,
        padding=[(ph, ph), (pw, pw)],
        dimension_numbers=("NCHW", "OIHW", "NCHW"))
    y = y + params["conv_b"][None, :, None, None]
    s = params["bn_g"] / jnp.sqrt(params["bn_v"] + EPS)
    y = y * s[None, :, None, None] + (params["bn_b"] - params["bn_m"] * s)[None, :, None, None]
    return jax.nn.relu(y)


if __name__ == "__main__":
    key = jax.random.PRNGKey(0)
    ks = jax.random.split(key, 7)

    N, Cin, H, W = 2, 8, 16, 16           # module defaults: nin=8, nout=11
    Cout = 11
    KH, KW = KS

    x = jax.random.normal(ks[0], (N, Cin, H, W), jnp.float32)
    params = {
        "conv_w": 0.1 * jax.random.normal(ks[1], (Cout, Cin, KH, KW), jnp.float32),
        "conv_b": 0.1 * jax.random.normal(ks[2], (Cout,), jnp.float32),
        "bn_g": 1.0 + 0.1 * jax.random.normal(ks[3], (Cout,), jnp.float32),
        "bn_b": 0.1 * jax.random.normal(ks[4], (Cout,), jnp.float32),
        "bn_m": 0.1 * jax.random.normal(ks[5], (Cout,), jnp.float32),
        "bn_v": 0.5 + jnp.abs(jax.random.normal(ks[6], (Cout,), jnp.float32)),
    }

    out = jax.block_until_ready(conv2d_forward(x, params))
    ref = jax.block_until_ready(conv2d_reference(x, params))

    # Loose tolerance: the kernel streams bf16 operands (f32 accumulate),
    # the reference is all-f32.
    np.testing.assert_allclose(np.asarray(out), np.asarray(ref), rtol=5e-2, atol=5e-2)

    print("KERNEL_OK")
</pallas_src>

<mosaic_0001>
module attributes {stable_mosaic.version = 11 : i64} {
  func.func @_fused_conv_bn_relu_kernel(%arg0: i32, %arg1: i32, %arg2: memref<128x128xbf16, #tpu.memory_space<vmem>>, %arg3: memref<128x128xbf16, #tpu.memory_space<vmem>>, %arg4: memref<8x128xf32, #tpu.memory_space<vmem>>, %arg5: memref<128x128xf32, #tpu.memory_space<vmem>>) attributes {dimension_semantics = [#tpu.dimension_semantics<parallel>, #tpu.dimension_semantics<parallel>], iteration_bounds = array<i64: 1, 1>, scalar_prefetch = 0 : i64, scratch_operands = 0 : i64, tpu.core_type = #tpu.core_type<tc>, window_params = [{transform_indices = @transform_0, window_bounds = array<i64: 128, 128>}, {transform_indices = @transform_1, window_bounds = array<i64: 128, 128>}, {transform_indices = @transform_2, window_bounds = array<i64: 8, 128>}, {transform_indices = @transform_3, window_bounds = array<i64: 128, 128>}]} {
    %c0 = arith.constant 0 : index
    %c0_0 = arith.constant 0 : index
    %0 = vector.load %arg2[%c0, %c0_0] : memref<128x128xbf16, #tpu.memory_space<vmem>>, vector<128x128xbf16>
    %c0_1 = arith.constant 0 : index
    %c0_2 = arith.constant 0 : index
    %1 = vector.load %arg3[%c0_1, %c0_2] : memref<128x128xbf16, #tpu.memory_space<vmem>>, vector<128x128xbf16>
    %cst = arith.constant dense<0.000000e+00> : vector<128x128xf32>
    %2 = tpu.matmul %0, %1, %cst {dimension_numbers = #tpu.dot_dimension_numbers<[1], [0], [0], [1], [0, 0, 1, 1], [], []>} : vector<128x128xbf16>, vector<128x128xbf16>, vector<128x128xf32> -> vector<128x128xf32>
    %c0_3 = arith.constant 0 : index
    %c0_4 = arith.constant 0 : index
    %3 = vector.load %arg4[%c0_3, %c0_4] : memref<8x128xf32, #tpu.memory_space<vmem>>, vector<1x128xf32>
    %4 = vector.broadcast %3 : vector<1x128xf32> to vector<128x128xf32>
    %5 = arith.mulf %2, %4 : vector<128x128xf32>
    %c1 = arith.constant 1 : index
    %c0_5 = arith.constant 0 : index
    %6 = vector.load %arg4[%c1, %c0_5] : memref<8x128xf32, #tpu.memory_space<vmem>>, vector<1x128xf32>
    %7 = vector.broadcast %6 : vector<1x128xf32> to vector<128x128xf32>
    %8 = arith.addf %5, %7 : vector<128x128xf32>
    %cst_6 = arith.constant 0.000000e+00 : f32
    %9 = vector.broadcast %cst_6 : f32 to vector<128x128xf32>
    %10 = arith.maximumf %8, %9 : vector<128x128xf32>
    %c0_7 = arith.constant 0 : index
    %c0_8 = arith.constant 0 : index
    %11 = vector.load %arg5[%c0_7, %c0_8] : memref<128x128xf32, #tpu.memory_space<vmem>>, vector<128x128xf32>
    tpu.vector_store %arg5[%c0_7, %c0_8], %10 {strides = array<i32>} : memref<128x128xf32, #tpu.memory_space<vmem>>, vector<128x128xf32>,
    return
  }
  func.func @transform_0(%arg0: i32, %arg1: i32) -> (i32, i32) {
    %c0_i32 = arith.constant 0 : i32
    %c0_i32_0 = arith.constant 0 : i32
    return %arg0, %c0_i32 : i32, i32
  }
  func.func @transform_1(%arg0: i32, %arg1: i32) -> (i32, i32) {
    %c0_i32 = arith.constant 0 : i32
    %c0_i32_0 = arith.constant 0 : i32
    return %c0_i32, %arg1 : i32, i32
  }
  func.func @transform_2(%arg0: i32, %arg1: i32) -> (i32, i32) {
    %c0_i32 = arith.constant 0 : i32
    %c0_i32_0 = arith.constant 0 : i32
    return %c0_i32, %arg1 : i32, i32
  }
  func.func @transform_3(%arg0: i32, %arg1: i32) -> (i32, i32) {
    %c0_i32 = arith.constant 0 : i32
    return %arg0, %arg1 : i32, i32
  }
}

</mosaic_0001>

<llo_original>
// kernel: tpu_custom_call.1
$region0: #{tpu_custom_call.1}
  #allocation0 [shape = 'u32[]', space=smem, size = 0x4, offset = 0x4, fixed_abs, tag = 'smem constant byte address 0x4 - core index']
  #allocation1 [shape = 'u32[144,128]{1,0:T(1,128)}', space=vmem, size = 0x12000, scoped, tag = 'internal scratch']
  %s0 = inlined_call_operand.hbm [shape: bf16[128,128], index: 0, kind: input, shape index: {}]
  %s1 = inlined_call_operand.hbm [shape: bf16[128,128], index: 1, kind: input, shape index: {}]
  %s2 = inlined_call_operand.hbm [shape: f32[8,128], index: 2, kind: input, shape index: {}]
  %s3 = inlined_call_operand.hbm [shape: f32[128,128], index: 3, kind: output, shape index: {}]
  %s4 = sld [smem:[#allocation0]]
  $region34: #{tpu_custom_call.1} parent=0
    _
  %s6 = ssub.s32 1, %s4
  %s7 = scalar_select 0, %s6, %s4
  $region1: #{tpu_custom_call.1} parent=0
    #allocation2 [shape = 'u8[32768]{0}', space=vmem, size = 0x8000, scoped, tag = 'input window, operand 0, single buffered']
    #allocation3 [shape = 's32[1]{0}', space=sflag, size = 0x4, scoped, tag = 'scoped memory for tpu_custom_call.1']
    #allocation4 [shape = 's32[1]{0}', space=sflag, size = 0x4, scoped, tag = 'scoped memory for tpu_custom_call.1']
    #allocation5 [shape = 'u8[32768]{0}', space=vmem, size = 0x8000, scoped, tag = 'input window, operand 1, single buffered']
    #allocation6 [shape = 's32[1]{0}', space=sflag, size = 0x4, scoped, tag = 'scoped memory for tpu_custom_call.1']
    #allocation7 [shape = 'u8[4096]{0}', space=vmem, size = 0x1000, scoped, tag = 'input window, operand 2, single buffered']
    #allocation8 [shape = 'u8[65536]{0}', space=vmem, size = 0x10000, scoped, tag = 'output window, operand 0, single buffered']
    %8 = vsyncpa [#allocation3], 0
    %9 = vsyncpa [#allocation6], 0
    %10 = vsyncpa [#allocation4], 0
    // Predicated region
    $region2: #{tpu_custom_call.1} parent=1 // pred_check
      _
    $region3: #{tpu_custom_call.1} parent=1 // pred_check_branch
      %12 = sbr.rel (0) target = $region5
    $region4: #{tpu_custom_call.1} parent=1 // pred_region
      %s14 = ssub.s32 1024, 1024
      %15 = vsyncadd [#allocation3], %s14
      %s16 = sshll.u32 [#allocation2], 4
      %s17 = int_to_ptr.vmem [resolvable:$true] %s16
      %22 = dma.hbm_to_vmem [thread:$0]  %s0, 1024, %s17, [#allocation3], 64, 64, 4
    $region5: #{tpu_custom_call.1} parent=1 // pred_fallthru
      _
    // Predicated region
    $region6: #{tpu_custom_call.1} parent=1 // pred_check
      _
    $region7: #{tpu_custom_call.1} parent=1 // pred_check_branch
      %24 = sbr.rel (0) target = $region9
    $region8: #{tpu_custom_call.1} parent=1 // pred_region
      %s26 = ssub.s32 1024, 1024
      %27 = vsyncadd [#allocation6], %s26
      %s28 = sshll.u32 [#allocation5], 4
      %s29 = int_to_ptr.vmem [resolvable:$true] %s28
      %34 = dma.hbm_to_vmem [thread:$0]  %s1, 1024, %s29, [#allocation6], 64, 64, 4
    $region9: #{tpu_custom_call.1} parent=1 // pred_fallthru
      _
    // Predicated region
    $region10: #{tpu_custom_call.1} parent=1 // pred_check
      _
    $region11: #{tpu_custom_call.1} parent=1 // pred_check_branch
      %36 = sbr.rel (0) target = $region13
    $region12: #{tpu_custom_call.1} parent=1 // pred_region
      %s38 = ssub.s32 128, 128
      %39 = vsyncadd [#allocation6], %s38
      %s41 = sshll.u32 [#allocation7], 4
      %s42 = int_to_ptr.vmem [resolvable:$true] %s41
      %44 = dma.hbm_to_vmem [thread:$0]  %s2, 128, %s42, [#allocation6]
    $region13: #{tpu_custom_call.1} parent=1 // pred_fallthru
      _
    // Predicated region
    $region14: #{tpu_custom_call.1} parent=1 // pred_check
      _
    $region15: #{tpu_custom_call.1} parent=1 // pred_check_branch
      %46 = sbr.rel (0) target = $region17
    $region16: #{tpu_custom_call.1} parent=1 // pred_region
      %47 = dma.done [#allocation3], 1024
    $region17: #{tpu_custom_call.1} parent=1 // pred_fallthru
      _
    // Predicated region
    $region18: #{tpu_custom_call.1} parent=1 // pred_check
      _
    $region19: #{tpu_custom_call.1} parent=1 // pred_check_branch
      %49 = sbr.rel (0) target = $region21
    $region20: #{tpu_custom_call.1} parent=1 // pred_region
      %50 = dma.done [#allocation6], 1024
    $region21: #{tpu_custom_call.1} parent=1 // pred_fallthru
      _
    // Predicated region
    $region22: #{tpu_custom_call.1} parent=1 // pred_check
      _
    $region23: #{tpu_custom_call.1} parent=1 // pred_check_branch
      %52 = sbr.rel (0) target = $region25
    $region24: #{tpu_custom_call.1} parent=1 // pred_region
      %53 = dma.done [#allocation6], 128
    $region25: #{tpu_custom_call.1} parent=1 // pred_fallthru
      _
    %v55 = vld [vmem:[#allocation2] sm:$0xf]
    %v56 = vld [vmem:[#allocation2 + $0x4] sm:$0xf]
    %v57 = vld [vmem:[#allocation2 + $0x8] sm:$0xf]
    %v58 = vld [vmem:[#allocation2 + $0xc] sm:$0xf]
    %v59 = vld [vmem:[#allocation2 + $0x10] sm:$0xf]
    %v60 = vld [vmem:[#allocation2 + $0x14] sm:$0xf]
    %v61 = vld [vmem:[#allocation2 + $0x18] sm:$0xf]
    %v62 = vld [vmem:[#allocation2 + $0x1c] sm:$0xf]
    %v63 = vld [vmem:[#allocation2 + $0x20] sm:$0xf]
    %v64 = vld [vmem:[#allocation2 + $0x24] sm:$0xf]
    %v65 = vld [vmem:[#allocation2 + $0x28] sm:$0xf]
    %v66 = vld [vmem:[#allocation2 + $0x2c] sm:$0xf]
    %v67 = vld [vmem:[#allocation2 + $0x30] sm:$0xf]
    %v68 = vld [vmem:[#allocation2 + $0x34] sm:$0xf]
    %v69 = vld [vmem:[#allocation2 + $0x38] sm:$0xf]
    %v70 = vld [vmem:[#allocation2 + $0x3c] sm:$0xf]
    %v71 = vld [vmem:[#allocation5] sm:$0xf]
    %v72 = vld [vmem:[#allocation5 + $0x4] sm:$0xf]
    %v73 = vld [vmem:[#allocation5 + $0x8] sm:$0xf]
    %v74 = vld [vmem:[#allocation5 + $0xc] sm:$0xf]
    %v75 = vld [vmem:[#allocation5 + $0x10] sm:$0xf]
    %v76 = vld [vmem:[#allocation5 + $0x14] sm:$0xf]
    %v77 = vld [vmem:[#allocation5 + $0x18] sm:$0xf]
    %v78 = vld [vmem:[#allocation5 + $0x1c] sm:$0xf]
    %v79 = vld [vmem:[#allocation5 + $0x20] sm:$0xf]
    %v80 = vld [vmem:[#allocation5 + $0x24] sm:$0xf]
    %v81 = vld [vmem:[#allocation5 + $0x28] sm:$0xf]
    %v82 = vld [vmem:[#allocation5 + $0x2c] sm:$0xf]
    %v83 = vld [vmem:[#allocation5 + $0x30] sm:$0xf]
    %v84 = vld [vmem:[#allocation5 + $0x34] sm:$0xf]
    %v85 = vld [vmem:[#allocation5 + $0x38] sm:$0xf]
    %v86 = vld [vmem:[#allocation5 + $0x3c] sm:$0xf]
    %v103 = vunpack.c.l.b16 %v55
    %v104 = vunpack.c.l.b16 %v56
    %v105 = vunpack.c.l.b16 %v57
    %v106 = vunpack.c.l.b16 %v58
    %v107 = vunpack.c.l.b16 %v59
    %v108 = vunpack.c.l.b16 %v60
    %v109 = vunpack.c.l.b16 %v61
    %v110 = vunpack.c.l.b16 %v62
    %v111 = vunpack.c.l.b16 %v63
    %v112 = vunpack.c.l.b16 %v64
    %v113 = vunpack.c.l.b16 %v65
    %v114 = vunpack.c.l.b16 %v66
    %v115 = vunpack.c.l.b16 %v67
    %v116 = vunpack.c.l.b16 %v68
    %v117 = vunpack.c.l.b16 %v69
    %v118 = vunpack.c.l.b16 %v70
    %v119 = vpack.c.b16 %v104, %v103
    %v120 = vpack.c.b16 %v106, %v105
    %v121 = vpack.c.b16 %v108, %v107
    %v122 = vpack.c.b16 %v110, %v109
    %v123 = vpack.c.b16 %v112, %v111
    %v124 = vpack.c.b16 %v114, %v113
    %v125 = vpack.c.b16 %v116, %v115
    %v126 = vpack.c.b16 %v118, %v117
    %v151 = vunpack.c.l.b16 %v71
    %v152 = vunpack.c.l.b16 %v72
    %v153 = vunpack.c.l.b16 %v73
    %v154 = vunpack.c.l.b16 %v74
    %v155 = vunpack.c.l.b16 %v75
    %v156 = vunpack.c.l.b16 %v76
    %v157 = vunpack.c.l.b16 %v77
    %v158 = vunpack.c.l.b16 %v78
    %v159 = vunpack.c.l.b16 %v79
    %v160 = vunpack.c.l.b16 %v80
    %v161 = vunpack.c.l.b16 %v81
    %v162 = vunpack.c.l.b16 %v82
    %v163 = vunpack.c.l.b16 %v83
    %v164 = vunpack.c.l.b16 %v84
    %v165 = vunpack.c.l.b16 %v85
    %v166 = vunpack.c.l.b16 %v86
    %v167 = vpack.c.b16 %v152, %v151
    %v168 = vpack.c.b16 %v154, %v153
    %v169 = vpack.c.b16 %v156, %v155
    %v170 = vpack.c.b16 %v158, %v157
    %v171 = vpack.c.b16 %v160, %v159
    %v172 = vpack.c.b16 %v162, %v161
    %v173 = vpack.c.b16 %v164, %v163
    %v174 = vpack.c.b16 %v166, %v165
    %183 = vmatprep.subr.bf16.mxu0 0
    %184 = vmatpush1.bf16.msra.mxu0 %v167
    %185 = vmatprep.subr.bf16.mxu0 0
    %186 = vmatpush1.bf16.msra.mxu0 %v168
    %187 = vmatprep.subr.bf16.mxu0 0
    %188 = vmatpush1.bf16.msra.mxu0 %v169
    %189 = vmatprep.subr.bf16.mxu0 0
    %190 = vmatpush1.bf16.msra.mxu0 %v170
    %191 = vmatprep.subr.bf16.mxu0 0
    %192 = vmatpush1.bf16.msra.mxu0 %v171
    %193 = vmatprep.subr.bf16.mxu0 0
    %194 = vmatpush1.bf16.msra.mxu0 %v172
    %195 = vmatprep.subr.bf16.mxu0 0
    %196 = vmatpush1.bf16.msra.mxu0 %v173
    %197 = vmatprep.subr.bf16.mxu0 0
    %198 = vmatpush1.bf16.msra.mxu0 %v174
    %199 = vmatprep.subr.bf16.mxu0 0
    %200 = vmatpush1.bf16.msra.mxu0 0
    %201 = vmatprep.subr.bf16.mxu0 0
    %202 = vmatpush1.bf16.msra.mxu0 0
    %203 = vmatprep.subr.bf16.mxu0 0
    %204 = vmatpush1.bf16.msra.mxu0 0
    %205 = vmatprep.subr.bf16.mxu0 0
    %206 = vmatpush1.bf16.msra.mxu0 0
    %207 = vmatprep.subr.bf16.mxu0 0
    %208 = vmatpush1.bf16.msra.mxu0 0
    %209 = vmatprep.subr.bf16.mxu0 0
    %210 = vmatpush1.bf16.msra.mxu0 0
    %211 = vmatprep.subr.bf16.mxu0 0
    %212 = vmatpush1.bf16.msra.mxu0 0
    %213 = vmatprep.subr.bf16.mxu0 0
    %214 = vmatpush1.bf16.msra.mxu0 0
    %215 = vmatprep.mubr.bf16.mxu0 0
    %216 = vmatmul.mubr.bf16.gmra.mrb[0].mxu0 %v119
    %v217 = vpop.f32.mrb[0].mxu0
    %v218 = vadd.f32 0.0, %v217
    %v219 = vpop.f32.mrb[0].mxu0
    %v220 = vpop.f32.mrb[0].mxu0
    %v221 = vadd.f32 0.0, %v220
    %v222 = vpop.f32.mrb[0].mxu0
    %223 = vmatprep.mubr.bf16.mxu0 0
    %224 = vmatmul.mubr.bf16.gmra.mrb[0].mxu0 %v120
    %v225 = vpop.f32.mrb[0].mxu0
    %v226 = vadd.f32 0.0, %v225
    %v227 = vpop.f32.mrb[0].mxu0
    %v228 = vpop.f32.mrb[0].mxu0
    %v229 = vadd.f32 0.0, %v228
    %v230 = vpop.f32.mrb[0].mxu0
    %231 = vmatprep.mubr.bf16.mxu0 0
    %232 = vmatmul.mubr.bf16.gmra.mrb[0].mxu0 %v121
    %v233 = vpop.f32.mrb[0].mxu0
    %v234 = vadd.f32 0.0, %v233
    %v235 = vpop.f32.mrb[0].mxu0
    %v236 = vpop.f32.mrb[0].mxu0
    %v237 = vadd.f32 0.0, %v236
    %v238 = vpop.f32.mrb[0].mxu0
    %239 = vmatprep.mubr.bf16.mxu0 0
    %240 = vmatmul.mubr.bf16.gmra.mrb[0].mxu0 %v122
    %v241 = vpop.f32.mrb[0].mxu0
    %v242 = vadd.f32 0.0, %v241
    %v243 = vpop.f32.mrb[0].mxu0
    %v244 = vpop.f32.mrb[0].mxu0
    %v245 = vadd.f32 0.0, %v244
    %v246 = vpop.f32.mrb[0].mxu0
    %247 = vmatprep.mubr.bf16.mxu0 0
    %248 = vmatmul.mubr.bf16.gmra.mrb[0].mxu0 %v123
    %v249 = vpop.f32.mrb[0].mxu0
    %v250 = vadd.f32 0.0, %v249
    %v251 = vpop.f32.mrb[0].mxu0
    %v252 = vpop.f32.mrb[0].mxu0
    %v253 = vadd.f32 0.0, %v252
    %v254 = vpop.f32.mrb[0].mxu0
    %255 = vmatprep.mubr.bf16.mxu0 0
    %256 = vmatmul.mubr.bf16.gmra.mrb[0].mxu0 %v124
    %v257 = vpop.f32.mrb[0].mxu0
    %v258 = vadd.f32 0.0, %v257
    %v259 = vpop.f32.mrb[0].mxu0
    %v260 = vpop.f32.mrb[0].mxu0
    %v261 = vadd.f32 0.0, %v260
    %v262 = vpop.f32.mrb[0].mxu0
    %263 = vmatprep.mubr.bf16.mxu0 0
    %264 = vmatmul.mubr.bf16.gmra.mrb[0].mxu0 %v125
    %v265 = vpop.f32.mrb[0].mxu0
    %v266 = vadd.f32 0.0, %v265
    %v267 = vpop.f32.mrb[0].mxu0
    %v268 = vpop.f32.mrb[0].mxu0
    %v269 = vadd.f32 0.0, %v268
    %v270 = vpop.f32.mrb[0].mxu0
    %271 = vmatprep.mubr.bf16.mxu0 0
    %272 = vmatmul.mubr.bf16.gmra.mrb[0].mxu0 %v126
    %v273 = vpop.f32.mrb[0].mxu0
    %v274 = vadd.f32 0.0, %v273
    %v275 = vpop.f32.mrb[0].mxu0
    %v276 = vpop.f32.mrb[0].mxu0
    %v277 = vadd.f32 0.0, %v276
    %v278 = vpop.f32.mrb[0].mxu0
    %279 = vdwg.mxu0
    %v280 = vld [vmem:[#allocation7] sm:$0x1]
    %v281 = vlaneseq
    %v282 = vshrl.u32 %v281, 7
    %v283 = vsub.s32 0, %v282
    %v284 = vrot.slane %v280, %v283
    %v285 = vmul.f32 %v218, %v284
    %v286 = vmul.f32 %v221, %v284
    %v287 = vmul.f32 %v226, %v284
    %v288 = vmul.f32 %v229, %v284
    %v289 = vmul.f32 %v234, %v284
    %v290 = vmul.f32 %v237, %v284
    %v291 = vmul.f32 %v242, %v284
    %v292 = vmul.f32 %v245, %v284
    %v293 = vmul.f32 %v250, %v284
    %v294 = vmul.f32 %v253, %v284
    %v295 = vmul.f32 %v258, %v284
    %v296 = vmul.f32 %v261, %v284
    %v297 = vmul.f32 %v266, %v284
    %v298 = vmul.f32 %v269, %v284
    %v299 = vmul.f32 %v274, %v284
    %v300 = vmul.f32 %v277, %v284
    %v301 = vld [vmem:[#allocation7 + $0x1] sm:$0x1]
    %v302 = vlaneseq
    %v303 = vshrl.u32 %v302, 7
    %v304 = vsub.s32 0, %v303
    %v305 = vrot.slane %v301, %v304
    %v306 = vadd.f32 %v285, %v305
    %v307 = vadd.f32 %v286, %v305
    %v308 = vadd.f32 %v287, %v305
    %v309 = vadd.f32 %v288, %v305
    %v310 = vadd.f32 %v289, %v305
    %v311 = vadd.f32 %v290, %v305
    %v312 = vadd.f32 %v291, %v305
    %v313 = vadd.f32 %v292, %v305
    %v314 = vadd.f32 %v293, %v305
    %v315 = vadd.f32 %v294, %v305
    %v316 = vadd.f32 %v295, %v305
    %v317 = vadd.f32 %v296, %v305
    %v318 = vadd.f32 %v297, %v305
    %v319 = vadd.f32 %v298, %v305
    %v320 = vadd.f32 %v299, %v305
    %v321 = vadd.f32 %v300, %v305
    %v322 = vmax.f32 %v306, 0.0
    %v323 = vmax.f32 %v307, 0.0
    %v324 = vmax.f32 %v308, 0.0
    %v325 = vmax.f32 %v309, 0.0
    %v326 = vmax.f32 %v310, 0.0
    %v327 = vmax.f32 %v311, 0.0
    %v328 = vmax.f32 %v312, 0.0
    %v329 = vmax.f32 %v313, 0.0
    %v330 = vmax.f32 %v314, 0.0
    %v331 = vmax.f32 %v315, 0.0
    %v332 = vmax.f32 %v316, 0.0
    %v333 = vmax.f32 %v317, 0.0
    %v334 = vmax.f32 %v318, 0.0
    %v335 = vmax.f32 %v319, 0.0
    %v336 = vmax.f32 %v320, 0.0
    %v337 = vmax.f32 %v321, 0.0
    %338 = vst [vmem:[#allocation8] sm:$0xff] %v322
    %339 = vst [vmem:[#allocation8 + $0x8] sm:$0xff] %v323
    %340 = vst [vmem:[#allocation8 + $0x10] sm:$0xff] %v324
    %341 = vst [vmem:[#allocation8 + $0x18] sm:$0xff] %v325
    %342 = vst [vmem:[#allocation8 + $0x20] sm:$0xff] %v326
    %343 = vst [vmem:[#allocation8 + $0x28] sm:$0xff] %v327
    %344 = vst [vmem:[#allocation8 + $0x30] sm:$0xff] %v328
    %345 = vst [vmem:[#allocation8 + $0x38] sm:$0xff] %v329
    %346 = vst [vmem:[#allocation8 + $0x40] sm:$0xff] %v330
    %347 = vst [vmem:[#allocation8 + $0x48] sm:$0xff] %v331
    %348 = vst [vmem:[#allocation8 + $0x50] sm:$0xff] %v332
    %349 = vst [vmem:[#allocation8 + $0x58] sm:$0xff] %v333
    %350 = vst [vmem:[#allocation8 + $0x60] sm:$0xff] %v334
    %351 = vst [vmem:[#allocation8 + $0x68] sm:$0xff] %v335
    %352 = vst [vmem:[#allocation8 + $0x70] sm:$0xff] %v336
    %353 = vst [vmem:[#allocation8 + $0x78] sm:$0xff] %v337
    // Predicated region
    $region26: #{tpu_custom_call.1} parent=1 // pred_check
      _
    $region27: #{tpu_custom_call.1} parent=1 // pred_check_branch
      %355 = sbr.rel (0) target = $region29
    $region28: #{tpu_custom_call.1} parent=1 // pred_region
      %s357 = ssub.s32 2048, 2048
      %358 = vsyncadd [#allocation4], %s357
      %s359 = sshll.u32 [#allocation8], 4
      %s360 = int_to_ptr.vmem [resolvable:$true] %s359
      %365 = dma.vmem_to_hbm [thread:$0]  %s360, 2048, %s3, [#allocation4], 128, 128, 8
    $region29: #{tpu_custom_call.1} parent=1 // pred_fallthru
      _
    // Predicated region
    $region30: #{tpu_custom_call.1} parent=1 // pred_check
      _
    $region31: #{tpu_custom_call.1} parent=1 // pred_check_branch
      %367 = sbr.rel (0) target = $region33
    $region32: #{tpu_custom_call.1} parent=1 // pred_region
      %368 = dma.done [#allocation4], 2048
    $region33: #{tpu_custom_call.1} parent=1 // pred_fallthru
      _
    %369 = vsyncpa [#allocation3], 1
    %370 = vsyncpa [#allocation6], 1
    %371 = vsyncpa [#allocation4], 1

</llo_original>
